<compile_context>
chip_gen: v7x
topology: tpu7x:2x2x1
jax: 0.10.0
libtpu: 0.0.40
codegen_flags: <defaults>
</compile_context>

<pallas_src>
from collections import namedtuple

import numpy as np
import jax
import jax.numpy as jnp
from jax.experimental import pallas as pl
from jax.experimental.pallas import tpu as pltpu


PersistenceInformation = namedtuple(
    "PersistenceInformation", ["pairing", "diagram", "dimension"]
)


# -----------------------------------------------------------------------------
# Pallas kernel: pairwise Minkowski distances (torch.cdist(x, x, p))
# -----------------------------------------------------------------------------
def _make_cdist_kernel(p, ncoords):
    """Build a kernel computing one (TM, TN) tile of the distance matrix.

    Refs seen by the kernel:
      xr_ref  : (TM, D)  row-point coordinates
      xct_ref : (D, TN)  column-point coordinates (pre-transposed, lane-dense)
      d_ref   : (TM, TN) output distances
    """
    p = float(p)
    p_is_int = (p == int(p)) and p >= 1.0

    def cdist_kernel(xr_ref, xct_ref, d_ref):
        xr = xr_ref[...].astype(jnp.float32)    # (TM, D)
        xct = xct_ref[...].astype(jnp.float32)  # (D, TN)
        acc = jnp.zeros(d_ref.shape, jnp.float32)
        # Unrolled loop over the coordinate dimension: every op works on a
        # lane-dense (TM, TN) slab (pure VPU; no MXU, no (N, N, D) blow-up,
        # no pow on the single EUP slot for integer p).
        for k in range(ncoords):
            diff = xr[:, k:k + 1] - xct[k:k + 1, :]      # (TM, 1)-(1, TN)
            if p == 2.0:
                acc = acc + diff * diff
            else:
                a = jnp.abs(diff)
                if p_is_int:
                    term = a
                    for _ in range(int(p) - 1):          # multiply chain
                        term = term * a
                else:
                    term = a ** p
                acc = acc + term
        if p == 2.0:
            # sqrt stays in-kernel: EUP slot is otherwise idle (store-bound).
            d_ref[...] = jnp.sqrt(acc).astype(d_ref.dtype)
        elif p == 1.0:
            d_ref[...] = acc.astype(d_ref.dtype)
        else:
            d_ref[...] = jnp.where(
                acc > 0.0, acc ** (1.0 / p), 0.0
            ).astype(d_ref.dtype)

    return cdist_kernel


def pairwise_distances(x, p=2):
    """Batched pairwise Minkowski distances via a tiled Pallas TPU kernel.

    x : (B, N, D) array.  Returns (B, N, N) float32, == torch.cdist(x, x, p).
    """
    x = jnp.asarray(x, jnp.float32)
    b, n, d = x.shape

    # Lane-dense tiling of the (N, N) output: tiles are multiples of 128 and
    # capped at 512x512 (1 MiB f32 per buffer, double-buffered 2 MiB) so VMEM
    # stays bounded on every generation (v5e 16 MiB scoped, v7x 64 MiB total).
    if n <= 512:
        tile = 128 * pl.cdiv(n, 128)
    else:
        tile = 512
    n_pad = tile * pl.cdiv(n, tile)

    x_p = x if n_pad == n else jnp.pad(x, ((0, 0), (0, n_pad - n), (0, 0)))
    # Pre-transposed copy so the kernel reads lane-dense "column" coordinate
    # rows with zero in-kernel transpose / XLU work.  (B*D*Np*4 bytes, tiny.)
    x_t = jnp.transpose(x_p, (0, 2, 1))                  # (B, D, Np)

    grid = (b, n_pad // tile, n_pad // tile)
    kernel = _make_cdist_kernel(p, d)

    cost = pl.CostEstimate(
        flops=3 * b * n_pad * n_pad * d,
        transcendentals=b * n_pad * n_pad,
        bytes_accessed=4 * (b * n_pad * n_pad + 2 * b * n_pad * d),
    )

    dist = pl.pallas_call(
        kernel,
        out_shape=jax.ShapeDtypeStruct((b, n_pad, n_pad), jnp.float32),
        grid_spec=pltpu.PrefetchScalarGridSpec(
            num_scalar_prefetch=0,
            grid=grid,
            in_specs=[
                # Row tile: depends only on (b, i) -> not re-DMA'd across j.
                pl.BlockSpec((None, tile, d), lambda bb, i, j: (bb, i, 0)),
                # Column tile (transposed): depends only on (b, j).
                pl.BlockSpec((None, d, tile), lambda bb, i, j: (bb, 0, j)),
            ],
            out_specs=pl.BlockSpec(
                (None, tile, tile), lambda bb, i, j: (bb, i, j)
            ),
        ),
        compiler_params=pltpu.CompilerParams(
            # No reduction axis: all grid axes are independent.
            dimension_semantics=("parallel", "parallel", "parallel"),
            vmem_limit_bytes=32 * 1024 * 1024,
        ),
        cost_estimate=cost,
    )(x_p, x_t)

    return dist[:, :n, :n]


# -----------------------------------------------------------------------------
# Host-side glue: dimension-0 generators (minimum-spanning-tree / elder rule),
# reproducing the [birth_vertex, edge_u, edge_v] layout of ripser's dim-0 gens.
# -----------------------------------------------------------------------------
def _h0_generators(dist_np):
    n = dist_np.shape[0]
    parent = list(range(n))

    def find(a):
        while parent[a] != a:
            parent[a] = parent[parent[a]]
            a = parent[a]
        return a

    iu, ju = np.triu_indices(n, k=1)
    order = np.argsort(dist_np[iu, ju], kind="stable")
    gens = []
    for e in order:
        u, v = int(iu[e]), int(ju[e])
        ru, rv = find(u), find(v)
        if ru != rv:
            # Elder rule (all vertices born at 0, ties broken by index):
            # the component with the larger representative index dies.
            birth_vertex = max(ru, rv)
            parent[max(ru, rv)] = min(ru, rv)
            gens.append((birth_vertex, u, v))
            if len(gens) == n - 1:
                break
    return np.asarray(gens, dtype=np.int64).reshape(-1, 3)


# -----------------------------------------------------------------------------
# Module wrapper mirroring VietorisRipsComplex.forward semantics.
# -----------------------------------------------------------------------------
class VietorisRipsComplexPallas:
    def __init__(self, dim=1, p=2, **kwargs):
        self.dim = dim
        self.p = p
        self.ripser_params = {"return_generators": True, "maxdim": self.dim}
        self.ripser_params.update(kwargs)

    def __call__(self, x):
        if isinstance(x, list):
            return [self._forward(jnp.asarray(x_)) for x_ in x]
        x = jnp.asarray(x)
        if x.ndim == 3:
            return [self._forward(x_) for x_ in x]
        return self._forward(x)

    def _forward(self, x):
        # x : (N, D) single point cloud
        dist = pairwise_distances(x[None, ...], p=self.p)[0]  # Pallas kernel

        # Dimension-0 generators (what ripser_parallel returns in gens[0]).
        # TODO(synk): elder-rule tie-breaking for equal-length edges may pick
        # different (but equally valid) generator vertices than ripser.
        gens0 = _h0_generators(np.asarray(dist))

        creators = jnp.zeros((gens0.shape[0],), jnp.float32)
        destroyers = dist[gens0[:, 1], gens0[:, 2]]
        persistence_diagram = jnp.stack((creators, destroyers), axis=1)
        persistence_information = [
            PersistenceInformation(gens0, persistence_diagram, 0)
        ]

        if self.dim >= 1:
            # TODO(synk): ripser's dim>=1 persistence pairing requires
            # boundary-matrix reduction (sequential, data-dependent); no clean
            # Pallas equivalent.
            pass

        return persistence_information


if __name__ == "__main__":
    key = jax.random.PRNGKey(0)
    # Batch of 2 point clouds, 16 points each, 3-dimensional coordinates.
    x = jax.random.normal(key, (2, 16, 3), dtype=jnp.float32)

    module = VietorisRipsComplexPallas(dim=1, p=2)
    out = module(x)

    # Block on all device results.
    for per_cloud in out:
        for pi in per_cloud:
            jax.block_until_ready(pi.diagram)

    # Sanity: p=2 distance kernel vs. pure-JAX reference (direct formulation).
    dist_kernel = jax.block_until_ready(pairwise_distances(x, p=2))
    diff = x[:, :, None, :] - x[:, None, :, :]
    dist_ref = jnp.sqrt(jnp.sum(diff * diff, axis=-1))
    np.testing.assert_allclose(
        np.asarray(dist_kernel), np.asarray(dist_ref), rtol=1e-4, atol=1e-4
    )

    # Sanity: general Minkowski path (p = 3, integer multiply-chain branch).
    dist3 = jax.block_until_ready(pairwise_distances(x, p=3))
    dp3 = jnp.sum(jnp.abs(diff) ** 3, axis=-1)
    dist3_ref = jnp.where(dp3 > 0, dp3 ** (1.0 / 3.0), 0.0)
    np.testing.assert_allclose(
        np.asarray(dist3), np.asarray(dist3_ref), rtol=1e-3, atol=1e-3
    )

    # Basic shape checks on the persistence output (n-1 H0 pairs per cloud).
    for per_cloud in out:
        assert per_cloud[0].pairing.shape == (15, 3)
        assert per_cloud[0].diagram.shape == (15, 2)
        assert per_cloud[0].dimension == 0

    print("KERNEL_OK")
</pallas_src>

<mosaic_0001>
module attributes {stable_mosaic.version = 11 : i64} {
  func.func @cdist_kernel(%arg0: i32, %arg1: i32, %arg2: i32, %arg3: memref<1x128x3xf32, #tpu.memory_space<vmem>>, %arg4: memref<1x3x128xf32, #tpu.memory_space<vmem>>, %arg5: memref<1x128x128xf32, #tpu.memory_space<vmem>>) attributes {dimension_semantics = [#tpu.dimension_semantics<parallel>, #tpu.dimension_semantics<parallel>, #tpu.dimension_semantics<parallel>], iteration_bounds = array<i64: 1, 1, 1>, scalar_prefetch = 0 : i64, scratch_operands = 0 : i64, tpu.core_type = #tpu.core_type<tc>, window_params = [{transform_indices = @transform_0, window_bounds = array<i64: 1, 128, 3>}, {transform_indices = @transform_1, window_bounds = array<i64: 1, 3, 128>}, {transform_indices = @transform_2, window_bounds = array<i64: 1, 128, 128>}]} {
    %c0 = arith.constant 0 : index
    %c0_0 = arith.constant 0 : index
    %c0_1 = arith.constant 0 : index
    %0 = vector.load %arg3[%c0, %c0_0, %c0_1] : memref<1x128x3xf32, #tpu.memory_space<vmem>>, vector<1x128x3xf32>
    %1 = vector.shape_cast %0 : vector<1x128x3xf32> to vector<128x3xf32>
    %c0_2 = arith.constant 0 : index
    %c0_3 = arith.constant 0 : index
    %c0_4 = arith.constant 0 : index
    %2 = vector.load %arg4[%c0_2, %c0_3, %c0_4] : memref<1x3x128xf32, #tpu.memory_space<vmem>>, vector<1x3x128xf32>
    %3 = vector.shape_cast %2 : vector<1x3x128xf32> to vector<3x128xf32>
    %cst = arith.constant 0.000000e+00 : f32
    %4 = vector.broadcast %cst : f32 to vector<128x128xf32>
    %5 = vector.extract_strided_slice %1 {offsets = [0, 0], sizes = [128, 1], strides = [1, 1]} : vector<128x3xf32> to vector<128x1xf32>
    %6 = vector.extract_strided_slice %3 {offsets = [0, 0], sizes = [1, 128], strides = [1, 1]} : vector<3x128xf32> to vector<1x128xf32>
    %7 = vector.broadcast %5 : vector<128x1xf32> to vector<128x128xf32>
    %8 = vector.broadcast %6 : vector<1x128xf32> to vector<128x128xf32>
    %9 = arith.subf %7, %8 : vector<128x128xf32>
    %10 = arith.mulf %9, %9 : vector<128x128xf32>
    %11 = arith.addf %4, %10 : vector<128x128xf32>
    %12 = vector.extract_strided_slice %1 {offsets = [0, 1], sizes = [128, 1], strides = [1, 1]} : vector<128x3xf32> to vector<128x1xf32>
    %13 = vector.extract_strided_slice %3 {offsets = [1, 0], sizes = [1, 128], strides = [1, 1]} : vector<3x128xf32> to vector<1x128xf32>
    %14 = vector.broadcast %12 : vector<128x1xf32> to vector<128x128xf32>
    %15 = vector.broadcast %13 : vector<1x128xf32> to vector<128x128xf32>
    %16 = arith.subf %14, %15 : vector<128x128xf32>
    %17 = arith.mulf %16, %16 : vector<128x128xf32>
    %18 = arith.addf %11, %17 : vector<128x128xf32>
    %19 = vector.extract_strided_slice %1 {offsets = [0, 2], sizes = [128, 1], strides = [1, 1]} : vector<128x3xf32> to vector<128x1xf32>
    %20 = vector.extract_strided_slice %3 {offsets = [2, 0], sizes = [1, 128], strides = [1, 1]} : vector<3x128xf32> to vector<1x128xf32>
    %21 = vector.broadcast %19 : vector<128x1xf32> to vector<128x128xf32>
    %22 = vector.broadcast %20 : vector<1x128xf32> to vector<128x128xf32>
    %23 = arith.subf %21, %22 : vector<128x128xf32>
    %24 = arith.mulf %23, %23 : vector<128x128xf32>
    %25 = arith.addf %18, %24 : vector<128x128xf32>
    %26 = math.sqrt %25 : vector<128x128xf32>
    %c0_5 = arith.constant 0 : index
    %c0_6 = arith.constant 0 : index
    %c0_7 = arith.constant 0 : index
    %27 = vector.load %arg5[%c0_5, %c0_6, %c0_7] : memref<1x128x128xf32, #tpu.memory_space<vmem>>, vector<1x128x128xf32>
    %28 = vector.shape_cast %27 : vector<1x128x128xf32> to vector<128x128xf32>
    %29 = vector.shape_cast %26 : vector<128x128xf32> to vector<1x128x128xf32>
    tpu.vector_store %arg5[%c0_5, %c0_6, %c0_7], %29 {strides = array<i32>} : memref<1x128x128xf32, #tpu.memory_space<vmem>>, vector<1x128x128xf32>,
    return
  }
  func.func @transform_0(%arg0: i32, %arg1: i32, %arg2: i32) -> (i32, i32, i32) {
    %c0_i32 = arith.constant 0 : i32
    %c0_i32_0 = arith.constant 0 : i32
    return %arg0, %arg1, %c0_i32 : i32, i32, i32
  }
  func.func @transform_1(%arg0: i32, %arg1: i32, %arg2: i32) -> (i32, i32, i32) {
    %c0_i32 = arith.constant 0 : i32
    %c0_i32_0 = arith.constant 0 : i32
    return %arg0, %c0_i32, %arg2 : i32, i32, i32
  }
  func.func @transform_2(%arg0: i32, %arg1: i32, %arg2: i32) -> (i32, i32, i32) {
    %c0_i32 = arith.constant 0 : i32
    return %arg0, %arg1, %arg2 : i32, i32, i32
  }
}

</mosaic_0001>

<llo_original>
// kernel: tpu_custom_call.1
$region0: #{tpu_custom_call.1}
  #allocation0 [shape = 'u32[]', space=smem, size = 0x4, offset = 0x4, fixed_abs, tag = 'smem constant byte address 0x4 - core index']
  #allocation1 [shape = 'u32[144,128]{1,0:T(1,128)}', space=vmem, size = 0x12000, scoped, tag = 'internal scratch']
  %s0 = inlined_call_operand.vmem [shape: f32[1,128,3], index: 0, kind: input, shape index: {}]
  %s1 = inlined_call_operand.vmem [shape: f32[1,3,128], index: 1, kind: input, shape index: {}]
  %s2 = inlined_call_operand.hbm [shape: f32[1,128,128], index: 2, kind: output, shape index: {}]
  %s3 = sld [smem:[#allocation0]]
  $region18: #{tpu_custom_call.1} parent=0
    _
  %s5 = ssub.s32 1, %s3
  %s6 = scalar_select 0, %s5, %s3
  $region1: #{tpu_custom_call.1} parent=0
    #allocation2 [shape = 'u8[65536]{0}', space=vmem, size = 0x10000, scoped, tag = 'output window, operand 0, single buffered']
    #allocation3 [shape = 's32[1]{0}', space=sflag, size = 0x4, scoped, tag = 'scoped memory for tpu_custom_call.1']
    %7 = vsyncpa [#allocation3], 0
    // Predicated region
    $region2: #{tpu_custom_call.1} parent=1 // pred_check
      _
    $region3: #{tpu_custom_call.1} parent=1 // pred_check_branch
      %9 = sbr.rel (0) target = $region5
    $region4: #{tpu_custom_call.1} parent=1 // pred_region
      _
    $region5: #{tpu_custom_call.1} parent=1 // pred_fallthru
      _
    // Predicated region
    $region6: #{tpu_custom_call.1} parent=1 // pred_check
      _
    $region7: #{tpu_custom_call.1} parent=1 // pred_check_branch
      %11 = sbr.rel (0) target = $region9
    $region8: #{tpu_custom_call.1} parent=1 // pred_region
      _
    $region9: #{tpu_custom_call.1} parent=1 // pred_fallthru
      _
    %v12 = vld [vmem:[%s0] sm:$0xff]
    %v13 = vld [vmem:[%s0 + $0x8] sm:$0xff]
    %v14 = vld [vmem:[%s0 + $0x10] sm:$0xff]
    %v15 = vld [vmem:[%s0 + $0x18] sm:$0xff]
    %v16 = vld [vmem:[%s0 + $0x20] sm:$0xff]
    %v17 = vld [vmem:[%s0 + $0x28] sm:$0xff]
    %v18 = vld [vmem:[%s0 + $0x30] sm:$0xff]
    %v19 = vld [vmem:[%s0 + $0x38] sm:$0xff]
    %v20 = vld [vmem:[%s0 + $0x40] sm:$0xff]
    %v21 = vld [vmem:[%s0 + $0x48] sm:$0xff]
    %v22 = vld [vmem:[%s0 + $0x50] sm:$0xff]
    %v23 = vld [vmem:[%s0 + $0x58] sm:$0xff]
    %v24 = vld [vmem:[%s0 + $0x60] sm:$0xff]
    %v25 = vld [vmem:[%s0 + $0x68] sm:$0xff]
    %v26 = vld [vmem:[%s0 + $0x70] sm:$0xff]
    %v27 = vld [vmem:[%s0 + $0x78] sm:$0xff]
    %v28 = vld [vmem:[%s1] sm:$0x7]
    %30 = vset.pattern.permute.xlu0 0
    %31 = vperm.xlu0 %30, %v12
    %v32 = vpop.permute.xlu0 %31
    %35 = vset.pattern.permute.xlu0 0
    %36 = vperm.xlu0 %35, %v13
    %v37 = vpop.permute.xlu0 %36
    %40 = vset.pattern.permute.xlu0 0
    %41 = vperm.xlu0 %40, %v14
    %v42 = vpop.permute.xlu0 %41
    %45 = vset.pattern.permute.xlu0 0
    %46 = vperm.xlu0 %45, %v15
    %v47 = vpop.permute.xlu0 %46
    %50 = vset.pattern.permute.xlu0 0
    %51 = vperm.xlu0 %50, %v16
    %v52 = vpop.permute.xlu0 %51
    %55 = vset.pattern.permute.xlu0 0
    %56 = vperm.xlu0 %55, %v17
    %v57 = vpop.permute.xlu0 %56
    %60 = vset.pattern.permute.xlu0 0
    %61 = vperm.xlu0 %60, %v18
    %v62 = vpop.permute.xlu0 %61
    %65 = vset.pattern.permute.xlu0 0
    %66 = vperm.xlu0 %65, %v19
    %v67 = vpop.permute.xlu0 %66
    %70 = vset.pattern.permute.xlu0 0
    %71 = vperm.xlu0 %70, %v20
    %v72 = vpop.permute.xlu0 %71
    %75 = vset.pattern.permute.xlu0 0
    %76 = vperm.xlu0 %75, %v21
    %v77 = vpop.permute.xlu0 %76
    %80 = vset.pattern.permute.xlu0 0
    %81 = vperm.xlu0 %80, %v22
    %v82 = vpop.permute.xlu0 %81
    %85 = vset.pattern.permute.xlu0 0
    %86 = vperm.xlu0 %85, %v23
    %v87 = vpop.permute.xlu0 %86
    %90 = vset.pattern.permute.xlu0 0
    %91 = vperm.xlu0 %90, %v24
    %v92 = vpop.permute.xlu0 %91
    %95 = vset.pattern.permute.xlu0 0
    %96 = vperm.xlu0 %95, %v25
    %v97 = vpop.permute.xlu0 %96
    %100 = vset.pattern.permute.xlu0 0
    %101 = vperm.xlu0 %100, %v26
    %v102 = vpop.permute.xlu0 %101
    %105 = vset.pattern.permute.xlu0 0
    %106 = vperm.xlu0 %105, %v27
    %v107 = vpop.permute.xlu0 %106
    %v109 = vlaneseq
    %v110 = vshrl.u32 %v109, 7
    %v111 = vsub.s32 0, %v110
    %v112 = vrot.slane %v28, %v111
    %v113 = vsub.f32 %v32, %v112
    %v114 = vsub.f32 %v37, %v112
    %v115 = vsub.f32 %v42, %v112
    %v116 = vsub.f32 %v47, %v112
    %v117 = vsub.f32 %v52, %v112
    %v118 = vsub.f32 %v57, %v112
    %v119 = vsub.f32 %v62, %v112
    %v120 = vsub.f32 %v67, %v112
    %v121 = vsub.f32 %v72, %v112
    %v122 = vsub.f32 %v77, %v112
    %v123 = vsub.f32 %v82, %v112
    %v124 = vsub.f32 %v87, %v112
    %v125 = vsub.f32 %v92, %v112
    %v126 = vsub.f32 %v97, %v112
    %v127 = vsub.f32 %v102, %v112
    %v128 = vsub.f32 %v107, %v112
    %v129 = vmul.f32 %v113, %v113
    %v130 = vmul.f32 %v114, %v114
    %v131 = vmul.f32 %v115, %v115
    %v132 = vmul.f32 %v116, %v116
    %v133 = vmul.f32 %v117, %v117
    %v134 = vmul.f32 %v118, %v118
    %v135 = vmul.f32 %v119, %v119
    %v136 = vmul.f32 %v120, %v120
    %v137 = vmul.f32 %v121, %v121
    %v138 = vmul.f32 %v122, %v122
    %v139 = vmul.f32 %v123, %v123
    %v140 = vmul.f32 %v124, %v124
    %v141 = vmul.f32 %v125, %v125
    %v142 = vmul.f32 %v126, %v126
    %v143 = vmul.f32 %v127, %v127
    %v144 = vmul.f32 %v128, %v128
    %v145 = vadd.f32 %v129, 0.0
    %v146 = vadd.f32 %v130, 0.0
    %v147 = vadd.f32 %v131, 0.0
    %v148 = vadd.f32 %v132, 0.0
    %v149 = vadd.f32 %v133, 0.0
    %v150 = vadd.f32 %v134, 0.0
    %v151 = vadd.f32 %v135, 0.0
    %v152 = vadd.f32 %v136, 0.0
    %v153 = vadd.f32 %v137, 0.0
    %v154 = vadd.f32 %v138, 0.0
    %v155 = vadd.f32 %v139, 0.0
    %v156 = vadd.f32 %v140, 0.0
    %v157 = vadd.f32 %v141, 0.0
    %v158 = vadd.f32 %v142, 0.0
    %v159 = vadd.f32 %v143, 0.0
    %v160 = vadd.f32 %v144, 0.0
    %161 = vset.pattern.permute.xlu0 1
    %162 = vperm.xlu0 %161, %v12
    %v163 = vpop.permute.xlu0 %162
    %165 = vset.pattern.permute.xlu0 1
    %166 = vperm.xlu0 %165, %v13
    %v167 = vpop.permute.xlu0 %166
    %169 = vset.pattern.permute.xlu0 1
    %170 = vperm.xlu0 %169, %v14
    %v171 = vpop.permute.xlu0 %170
    %173 = vset.pattern.permute.xlu0 1
    %174 = vperm.xlu0 %173, %v15
    %v175 = vpop.permute.xlu0 %174
    %177 = vset.pattern.permute.xlu0 1
    %178 = vperm.xlu0 %177, %v16
    %v179 = vpop.permute.xlu0 %178
    %181 = vset.pattern.permute.xlu0 1
    %182 = vperm.xlu0 %181, %v17
    %v183 = vpop.permute.xlu0 %182
    %185 = vset.pattern.permute.xlu0 1
    %186 = vperm.xlu0 %185, %v18
    %v187 = vpop.permute.xlu0 %186
    %189 = vset.pattern.permute.xlu0 1
    %190 = vperm.xlu0 %189, %v19
    %v191 = vpop.permute.xlu0 %190
    %193 = vset.pattern.permute.xlu0 1
    %194 = vperm.xlu0 %193, %v20
    %v195 = vpop.permute.xlu0 %194
    %197 = vset.pattern.permute.xlu0 1
    %198 = vperm.xlu0 %197, %v21
    %v199 = vpop.permute.xlu0 %198
    %201 = vset.pattern.permute.xlu0 1
    %202 = vperm.xlu0 %201, %v22
    %v203 = vpop.permute.xlu0 %202
    %205 = vset.pattern.permute.xlu0 1
    %206 = vperm.xlu0 %205, %v23
    %v207 = vpop.permute.xlu0 %206
    %209 = vset.pattern.permute.xlu0 1
    %210 = vperm.xlu0 %209, %v24
    %v211 = vpop.permute.xlu0 %210
    %213 = vset.pattern.permute.xlu0 1
    %214 = vperm.xlu0 %213, %v25
    %v215 = vpop.permute.xlu0 %214
    %217 = vset.pattern.permute.xlu0 1
    %218 = vperm.xlu0 %217, %v26
    %v219 = vpop.permute.xlu0 %218
    %221 = vset.pattern.permute.xlu0 1
    %222 = vperm.xlu0 %221, %v27
    %v223 = vpop.permute.xlu0 %222
    %v225 = vlaneseq
    %v226 = vshrl.u32 %v225, 7
    %v227 = vsub.s32 1, %v226
    %v228 = vrot.slane %v28, %v227
    %v229 = vsub.f32 %v163, %v228
    %v230 = vsub.f32 %v167, %v228
    %v231 = vsub.f32 %v171, %v228
    %v232 = vsub.f32 %v175, %v228
    %v233 = vsub.f32 %v179, %v228
    %v234 = vsub.f32 %v183, %v228
    %v235 = vsub.f32 %v187, %v228
    %v236 = vsub.f32 %v191, %v228
    %v237 = vsub.f32 %v195, %v228
    %v238 = vsub.f32 %v199, %v228
    %v239 = vsub.f32 %v203, %v228
    %v240 = vsub.f32 %v207, %v228
    %v241 = vsub.f32 %v211, %v228
    %v242 = vsub.f32 %v215, %v228
    %v243 = vsub.f32 %v219, %v228
    %v244 = vsub.f32 %v223, %v228
    %v245 = vmul.f32 %v229, %v229
    %v246 = vmul.f32 %v230, %v230
    %v247 = vmul.f32 %v231, %v231
    %v248 = vmul.f32 %v232, %v232
    %v249 = vmul.f32 %v233, %v233
    %v250 = vmul.f32 %v234, %v234
    %v251 = vmul.f32 %v235, %v235
    %v252 = vmul.f32 %v236, %v236
    %v253 = vmul.f32 %v237, %v237
    %v254 = vmul.f32 %v238, %v238
    %v255 = vmul.f32 %v239, %v239
    %v256 = vmul.f32 %v240, %v240
    %v257 = vmul.f32 %v241, %v241
    %v258 = vmul.f32 %v242, %v242
    %v259 = vmul.f32 %v243, %v243
    %v260 = vmul.f32 %v244, %v244
    %v261 = vadd.f32 %v145, %v245
    %v262 = vadd.f32 %v146, %v246
    %v263 = vadd.f32 %v147, %v247
    %v264 = vadd.f32 %v148, %v248
    %v265 = vadd.f32 %v149, %v249
    %v266 = vadd.f32 %v150, %v250
    %v267 = vadd.f32 %v151, %v251
    %v268 = vadd.f32 %v152, %v252
    %v269 = vadd.f32 %v153, %v253
    %v270 = vadd.f32 %v154, %v254
    %v271 = vadd.f32 %v155, %v255
    %v272 = vadd.f32 %v156, %v256
    %v273 = vadd.f32 %v157, %v257
    %v274 = vadd.f32 %v158, %v258
    %v275 = vadd.f32 %v159, %v259
    %v276 = vadd.f32 %v160, %v260
    %277 = vset.pattern.permute.xlu0 2
    %278 = vperm.xlu0 %277, %v12
    %v279 = vpop.permute.xlu0 %278
    %281 = vset.pattern.permute.xlu0 2
    %282 = vperm.xlu0 %281, %v13
    %v283 = vpop.permute.xlu0 %282
    %285 = vset.pattern.permute.xlu0 2
    %286 = vperm.xlu0 %285, %v14
    %v287 = vpop.permute.xlu0 %286
    %289 = vset.pattern.permute.xlu0 2
    %290 = vperm.xlu0 %289, %v15
    %v291 = vpop.permute.xlu0 %290
    %293 = vset.pattern.permute.xlu0 2
    %294 = vperm.xlu0 %293, %v16
    %v295 = vpop.permute.xlu0 %294
    %297 = vset.pattern.permute.xlu0 2
    %298 = vperm.xlu0 %297, %v17
    %v299 = vpop.permute.xlu0 %298
    %301 = vset.pattern.permute.xlu0 2
    %302 = vperm.xlu0 %301, %v18
    %v303 = vpop.permute.xlu0 %302
    %305 = vset.pattern.permute.xlu0 2
    %306 = vperm.xlu0 %305, %v19
    %v307 = vpop.permute.xlu0 %306
    %309 = vset.pattern.permute.xlu0 2
    %310 = vperm.xlu0 %309, %v20
    %v311 = vpop.permute.xlu0 %310
    %313 = vset.pattern.permute.xlu0 2
    %314 = vperm.xlu0 %313, %v21
    %v315 = vpop.permute.xlu0 %314
    %317 = vset.pattern.permute.xlu0 2
    %318 = vperm.xlu0 %317, %v22
    %v319 = vpop.permute.xlu0 %318
    %321 = vset.pattern.permute.xlu0 2
    %322 = vperm.xlu0 %321, %v23
    %v323 = vpop.permute.xlu0 %322
    %325 = vset.pattern.permute.xlu0 2
    %326 = vperm.xlu0 %325, %v24
    %v327 = vpop.permute.xlu0 %326
    %329 = vset.pattern.permute.xlu0 2
    %330 = vperm.xlu0 %329, %v25
    %v331 = vpop.permute.xlu0 %330
    %333 = vset.pattern.permute.xlu0 2
    %334 = vperm.xlu0 %333, %v26
    %v335 = vpop.permute.xlu0 %334
    %337 = vset.pattern.permute.xlu0 2
    %338 = vperm.xlu0 %337, %v27
    %v339 = vpop.permute.xlu0 %338
    %v341 = vlaneseq
    %v342 = vshrl.u32 %v341, 7
    %v343 = vsub.s32 2, %v342
    %v344 = vrot.slane %v28, %v343
    %v345 = vsub.f32 %v279, %v344
    %v346 = vsub.f32 %v283, %v344
    %v347 = vsub.f32 %v287, %v344
    %v348 = vsub.f32 %v291, %v344
    %v349 = vsub.f32 %v295, %v344
    %v350 = vsub.f32 %v299, %v344
    %v351 = vsub.f32 %v303, %v344
    %v352 = vsub.f32 %v307, %v344
    %v353 = vsub.f32 %v311, %v344
    %v354 = vsub.f32 %v315, %v344
    %v355 = vsub.f32 %v319, %v344
    %v356 = vsub.f32 %v323, %v344
    %v357 = vsub.f32 %v327, %v344
    %v358 = vsub.f32 %v331, %v344
    %v359 = vsub.f32 %v335, %v344
    %v360 = vsub.f32 %v339, %v344
    %v361 = vmul.f32 %v345, %v345
    %v362 = vmul.f32 %v346, %v346
    %v363 = vmul.f32 %v347, %v347
    %v364 = vmul.f32 %v348, %v348
    %v365 = vmul.f32 %v349, %v349
    %v366 = vmul.f32 %v350, %v350
    %v367 = vmul.f32 %v351, %v351
    %v368 = vmul.f32 %v352, %v352
    %v369 = vmul.f32 %v353, %v353
    %v370 = vmul.f32 %v354, %v354
    %v371 = vmul.f32 %v355, %v355
    %v372 = vmul.f32 %v356, %v356
    %v373 = vmul.f32 %v357, %v357
    %v374 = vmul.f32 %v358, %v358
    %v375 = vmul.f32 %v359, %v359
    %v376 = vmul.f32 %v360, %v360
    %v377 = vadd.f32 %v261, %v361
    %v378 = vadd.f32 %v262, %v362
    %v379 = vadd.f32 %v263, %v363
    %v380 = vadd.f32 %v264, %v364
    %v381 = vadd.f32 %v265, %v365
    %v382 = vadd.f32 %v266, %v366
    %v383 = vadd.f32 %v267, %v367
    %v384 = vadd.f32 %v268, %v368
    %v385 = vadd.f32 %v269, %v369
    %v386 = vadd.f32 %v270, %v370
    %v387 = vadd.f32 %v271, %v371
    %v388 = vadd.f32 %v272, %v372
    %v389 = vadd.f32 %v273, %v373
    %v390 = vadd.f32 %v274, %v374
    %v391 = vadd.f32 %v275, %v375
    %v392 = vadd.f32 %v276, %v376
    %v393 = vrsqrt.pop %v377
    %v394 = vmul.f32 %v377, %v393
    %vm395 = vcmp.eq.f32.partialorder %v377, inf
    %v396 = vsel %vm395, %v377, %v394
    %vm397 = vcmp.eq.f32.partialorder %v377, 0.0
    %v398 = vand.u32 %v377, 2147483648
    %v399 = vsel %vm397, %v398, %v396
    %v400 = vrsqrt.pop %v378
    %v401 = vmul.f32 %v378, %v400
    %vm402 = vcmp.eq.f32.partialorder %v378, inf
    %v403 = vsel %vm402, %v378, %v401
    %vm404 = vcmp.eq.f32.partialorder %v378, 0.0
    %v405 = vand.u32 %v378, 2147483648
    %v406 = vsel %vm404, %v405, %v403
    %v407 = vrsqrt.pop %v379
    %v408 = vmul.f32 %v379, %v407
    %vm409 = vcmp.eq.f32.partialorder %v379, inf
    %v410 = vsel %vm409, %v379, %v408
    %vm411 = vcmp.eq.f32.partialorder %v379, 0.0
    %v412 = vand.u32 %v379, 2147483648
    %v413 = vsel %vm411, %v412, %v410
    %v414 = vrsqrt.pop %v380
    %v415 = vmul.f32 %v380, %v414
    %vm416 = vcmp.eq.f32.partialorder %v380, inf
    %v417 = vsel %vm416, %v380, %v415
    %vm418 = vcmp.eq.f32.partialorder %v380, 0.0
    %v419 = vand.u32 %v380, 2147483648
    %v420 = vsel %vm418, %v419, %v417
    %v421 = vrsqrt.pop %v381
    %v422 = vmul.f32 %v381, %v421
    %vm423 = vcmp.eq.f32.partialorder %v381, inf
    %v424 = vsel %vm423, %v381, %v422
    %vm425 = vcmp.eq.f32.partialorder %v381, 0.0
    %v426 = vand.u32 %v381, 2147483648
    %v427 = vsel %vm425, %v426, %v424
    %v428 = vrsqrt.pop %v382
    %v429 = vmul.f32 %v382, %v428
    %vm430 = vcmp.eq.f32.partialorder %v382, inf
    %v431 = vsel %vm430, %v382, %v429
    %vm432 = vcmp.eq.f32.partialorder %v382, 0.0
    %v433 = vand.u32 %v382, 2147483648
    %v434 = vsel %vm432, %v433, %v431
    %v435 = vrsqrt.pop %v383
    %v436 = vmul.f32 %v383, %v435
    %vm437 = vcmp.eq.f32.partialorder %v383, inf
    %v438 = vsel %vm437, %v383, %v436
    %vm439 = vcmp.eq.f32.partialorder %v383, 0.0
    %v440 = vand.u32 %v383, 2147483648
    %v441 = vsel %vm439, %v440, %v438
    %v442 = vrsqrt.pop %v384
    %v443 = vmul.f32 %v384, %v442
    %vm444 = vcmp.eq.f32.partialorder %v384, inf
    %v445 = vsel %vm444, %v384, %v443
    %vm446 = vcmp.eq.f32.partialorder %v384, 0.0
    %v447 = vand.u32 %v384, 2147483648
    %v448 = vsel %vm446, %v447, %v445
    %v449 = vrsqrt.pop %v385
    %v450 = vmul.f32 %v385, %v449
    %vm451 = vcmp.eq.f32.partialorder %v385, inf
    %v452 = vsel %vm451, %v385, %v450
    %vm453 = vcmp.eq.f32.partialorder %v385, 0.0
    %v454 = vand.u32 %v385, 2147483648
    %v455 = vsel %vm453, %v454, %v452
    %v456 = vrsqrt.pop %v386
    %v457 = vmul.f32 %v386, %v456
    %vm458 = vcmp.eq.f32.partialorder %v386, inf
    %v459 = vsel %vm458, %v386, %v457
    %vm460 = vcmp.eq.f32.partialorder %v386, 0.0
    %v461 = vand.u32 %v386, 2147483648
    %v462 = vsel %vm460, %v461, %v459
    %v463 = vrsqrt.pop %v387
    %v464 = vmul.f32 %v387, %v463
    %vm465 = vcmp.eq.f32.partialorder %v387, inf
    %v466 = vsel %vm465, %v387, %v464
    %vm467 = vcmp.eq.f32.partialorder %v387, 0.0
    %v468 = vand.u32 %v387, 2147483648
    %v469 = vsel %vm467, %v468, %v466
    %v470 = vrsqrt.pop %v388
    %v471 = vmul.f32 %v388, %v470
    %vm472 = vcmp.eq.f32.partialorder %v388, inf
    %v473 = vsel %vm472, %v388, %v471
    %vm474 = vcmp.eq.f32.partialorder %v388, 0.0
    %v475 = vand.u32 %v388, 2147483648
    %v476 = vsel %vm474, %v475, %v473
    %v477 = vrsqrt.pop %v389
    %v478 = vmul.f32 %v389, %v477
    %vm479 = vcmp.eq.f32.partialorder %v389, inf
    %v480 = vsel %vm479, %v389, %v478
    %vm481 = vcmp.eq.f32.partialorder %v389, 0.0
    %v482 = vand.u32 %v389, 2147483648
    %v483 = vsel %vm481, %v482, %v480
    %v484 = vrsqrt.pop %v390
    %v485 = vmul.f32 %v390, %v484
    %vm486 = vcmp.eq.f32.partialorder %v390, inf
    %v487 = vsel %vm486, %v390, %v485
    %vm488 = vcmp.eq.f32.partialorder %v390, 0.0
    %v489 = vand.u32 %v390, 2147483648
    %v490 = vsel %vm488, %v489, %v487
    %v491 = vrsqrt.pop %v391
    %v492 = vmul.f32 %v391, %v491
    %vm493 = vcmp.eq.f32.partialorder %v391, inf
    %v494 = vsel %vm493, %v391, %v492
    %vm495 = vcmp.eq.f32.partialorder %v391, 0.0
    %v496 = vand.u32 %v391, 2147483648
    %v497 = vsel %vm495, %v496, %v494
    %v498 = vrsqrt.pop %v392
    %v499 = vmul.f32 %v392, %v498
    %vm500 = vcmp.eq.f32.partialorder %v392, inf
    %v501 = vsel %vm500, %v392, %v499
    %vm502 = vcmp.eq.f32.partialorder %v392, 0.0
    %v503 = vand.u32 %v392, 2147483648
    %v504 = vsel %vm502, %v503, %v501
    %505 = vst [vmem:[#allocation2] sm:$0xff] %v399
    %506 = vst [vmem:[#allocation2 + $0x8] sm:$0xff] %v406
    %507 = vst [vmem:[#allocation2 + $0x10] sm:$0xff] %v413
    %508 = vst [vmem:[#allocation2 + $0x18] sm:$0xff] %v420
    %509 = vst [vmem:[#allocation2 + $0x20] sm:$0xff] %v427
    %510 = vst [vmem:[#allocation2 + $0x28] sm:$0xff] %v434
    %511 = vst [vmem:[#allocation2 + $0x30] sm:$0xff] %v441
    %512 = vst [vmem:[#allocation2 + $0x38] sm:$0xff] %v448
    %513 = vst [vmem:[#allocation2 + $0x40] sm:$0xff] %v455
    %514 = vst [vmem:[#allocation2 + $0x48] sm:$0xff] %v462
    %515 = vst [vmem:[#allocation2 + $0x50] sm:$0xff] %v469
    %516 = vst [vmem:[#allocation2 + $0x58] sm:$0xff] %v476
    %517 = vst [vmem:[#allocation2 + $0x60] sm:$0xff] %v483
    %518 = vst [vmem:[#allocation2 + $0x68] sm:$0xff] %v490
    %519 = vst [vmem:[#allocation2 + $0x70] sm:$0xff] %v497
    %520 = vst [vmem:[#allocation2 + $0x78] sm:$0xff] %v504
    // Predicated region
    $region10: #{tpu_custom_call.1} parent=1 // pred_check
      _
    $region11: #{tpu_custom_call.1} parent=1 // pred_check_branch
      %522 = sbr.rel (0) target = $region13
    $region12: #{tpu_custom_call.1} parent=1 // pred_region
      %s524 = ssub.s32 2048, 2048
      %525 = vsyncadd [#allocation3], %s524
      %s526 = sshll.u32 [#allocation2], 4
      %s527 = int_to_ptr.vmem [resolvable:$true] %s526
      %532 = dma.vmem_to_hbm [thread:$0]  %s527, 2048, %s2, [#allocation3], 128, 128, 8
    $region13: #{tpu_custom_call.1} parent=1 // pred_fallthru
      _
    // Predicated region
    $region14: #{tpu_custom_call.1} parent=1 // pred_check
      _
    $region15: #{tpu_custom_call.1} parent=1 // pred_check_branch
      %534 = sbr.rel (0) target = $region17
    $region16: #{tpu_custom_call.1} parent=1 // pred_region
      %535 = dma.done [#allocation3], 2048
    $region17: #{tpu_custom_call.1} parent=1 // pred_fallthru
      _
    %536 = vsyncpa [#allocation3], 1

</llo_original>
